<compile_context>
chip_gen: v6e
topology: v6e:2x2x1
jax: 0.10.0
libtpu: 0.0.40
codegen_flags: <defaults>
</compile_context>

<pallas_src>
import functools

import jax
import jax.numpy as jnp
from jax.experimental import pallas as pl
from jax.experimental.pallas import tpu as pltpu


# ----------------------------------------------------------------------------
# Model configuration (small, consistent with the module's constructor).
# ----------------------------------------------------------------------------
INPUT_SIZES = [32, 32, 64]          # sum = 128 (lane-aligned total input)
EMBEDDING_SIZE = 32
LINEAR_SIZES = [64, 32]
OUTPUT_SIZE = 16

D_TOTAL = sum(INPUT_SIZES)
NUM_LAYERS = len(INPUT_SIZES)
NUM_LINEARS = len(LINEAR_SIZES)

MAX_TM = 1024                        # target row tile (amortize per-step overhead)


# ----------------------------------------------------------------------------
# Kernel
# ----------------------------------------------------------------------------
def _hmlstm_output_kernel(num_linears,
                          h_ref, wg_ref, we_ref, be_ref,
                          *rest):
    """rest = [W_i(bf16), b_i(f32)] * num_linears, Wo(bf16), bo(f32), out_ref(f32)."""
    out_ref = rest[-1]
    bo_ref = rest[-2]
    wo_ref = rest[-3]
    lin_refs = rest[:2 * num_linears]

    h = h_ref[...]                                      # (TM, D) f32
    h_bf = h.astype(jnp.bfloat16)                       # MXU operand

    # --- gates, pre-broadcast over each layer's column block (bf16 MXU, f32 acc) ---
    sg = jnp.dot(h_bf, wg_ref[...], preferred_element_type=jnp.float32)   # (TM, D)
    g = jax.nn.sigmoid(sg)                              # f32, lane-dense

    # gating in f32 (v5e has no bf16 VPU), then cast operand for the MXU
    gated = (h * g).astype(jnp.bfloat16)

    # --- sum of per-layer embedding Linears == one block matmul + summed bias ---
    s = jnp.dot(gated, we_ref[...], preferred_element_type=jnp.float32) + be_ref[...]
    x = jnp.maximum(s, 0.0)                             # ReLU, f32

    # --- fnn: chain of Linear + tanh (bf16 matmul operands, f32 elementwise) ---
    for i in range(num_linears):
        w = lin_refs[2 * i][...]                        # bf16
        b = lin_refs[2 * i + 1][...]                    # f32
        x = jnp.tanh(jnp.dot(x.astype(jnp.bfloat16), w,
                             preferred_element_type=jnp.float32) + b)

    # --- output projection, stored directly at its real width (no zero padding) ---
    out = jnp.dot(x.astype(jnp.bfloat16), wo_ref[...],
                  preferred_element_type=jnp.float32) + bo_ref[...]
    out_ref[...] = out.astype(out_ref.dtype)


# ----------------------------------------------------------------------------
# Wrapper
# ----------------------------------------------------------------------------
def _pick_tm(n):
    """Largest tile from a power-of-two ladder dividing n (8-sublane aligned)."""
    for tm in (MAX_TM, 512, 256, 128, 64, 32, 16, 8):
        if tm <= n and n % tm == 0:
            return tm
    return n   # tiny / ragged N: single full-extent block (always legal)


def hmlstm_output_forward(x, params):
    """x: (batch, seq, sum(INPUT_SIZES)) float32 -> (batch, seq, OUTPUT_SIZE) float32."""
    B, T, D = x.shape
    assert D == D_TOTAL
    N = B * T
    tm = _pick_tm(N)

    wg, we, be, lin_ws, lin_bs, wo, bo = params

    # Keep the activations f32 end-to-end at the HBM boundary (reshape is free,
    # bf16 cast happens per-tile inside the kernel).
    h = x.reshape(N, D)

    # Expand per-layer scalar gate weights to a column-broadcast (D, D) matrix:
    # sigmoid(h @ wg_exp)[:, c] == gate of the HMLSTM layer owning column c.
    cols = []
    for l, sz in enumerate(INPUT_SIZES):
        cols.append(jnp.broadcast_to(wg[:, l:l + 1], (D_TOTAL, sz)))
    wg_exp = jnp.concatenate(cols, axis=1).astype(jnp.bfloat16)

    # bf16 matmul operands for the (tiny) weights; biases stay f32.
    we_bf = we.astype(jnp.bfloat16)
    lin_w_bf = [w.astype(jnp.bfloat16) for w in lin_ws]
    wo_bf = wo.astype(jnp.bfloat16)

    kernel = functools.partial(_hmlstm_output_kernel, NUM_LINEARS)

    def const_spec(arr):
        # Full-array block, same block index every grid step -> Pallas fetches
        # it once and re-uses it on subsequent grid steps (no per-step DMA).
        return pl.BlockSpec(arr.shape, lambda i: (0,) * arr.ndim)

    lin_args, lin_specs = [], []
    for w, b in zip(lin_w_bf, lin_bs):
        lin_args += [w, b]
        lin_specs += [const_spec(w), const_spec(b)]

    in_specs = ([pl.BlockSpec((tm, D_TOTAL), lambda i: (i, 0)),
                 const_spec(wg_exp), const_spec(we_bf), const_spec(be)]
                + lin_specs
                + [const_spec(wo_bf), const_spec(bo)])

    out = pl.pallas_call(
        kernel,
        out_shape=jax.ShapeDtypeStruct((N, OUTPUT_SIZE), jnp.float32),
        grid_spec=pltpu.PrefetchScalarGridSpec(
            num_scalar_prefetch=0,
            grid=(N // tm,),
            in_specs=in_specs,
            out_specs=pl.BlockSpec((tm, OUTPUT_SIZE), lambda i: (i, 0)),
        ),
        compiler_params=pltpu.CompilerParams(
            dimension_semantics=("parallel",)),   # lets v7x shard rows over both TCs
    )(h, wg_exp, we_bf, be, *lin_args, wo_bf, bo)

    return out.reshape(B, T, OUTPUT_SIZE)


# ----------------------------------------------------------------------------
# Parameter construction (deterministic, in-script) + pure-JAX reference
# ----------------------------------------------------------------------------
def make_params(key):
    keys = jax.random.split(key, 16)
    k = iter(keys)

    def init(kk, shape, scale=0.1):
        return (scale * jax.random.normal(kk, shape)).astype(jnp.float32)

    # gate Linears: Linear(sum(input_sizes), 1, bias=False) per layer -> (D_total, L)
    wg = jnp.concatenate(
        [init(next(k), (D_TOTAL, 1)) for _ in range(NUM_LAYERS)], axis=1)

    # per-layer embedding Linears: Linear(input_size_l, E) -> block-stacked (D_total, E)
    we_blocks, be_sum = [], jnp.zeros((1, EMBEDDING_SIZE), jnp.float32)
    for sz in INPUT_SIZES:
        we_blocks.append(init(next(k), (sz, EMBEDDING_SIZE)))
        be_sum = be_sum + init(next(k), (1, EMBEDDING_SIZE))
    we = jnp.concatenate(we_blocks, axis=0)

    # fnn Linears
    lin_ws, lin_bs = [], []
    prev = EMBEDDING_SIZE
    for hsz in LINEAR_SIZES:
        lin_ws.append(init(next(k), (prev, hsz)))
        lin_bs.append(init(next(k), (1, hsz)))
        prev = hsz

    # output Linear
    wo = init(next(k), (prev, OUTPUT_SIZE))
    bo = init(next(k), (1, OUTPUT_SIZE))

    return wg, we, be_sum, lin_ws, lin_bs, wo, bo


def reference_forward(x, params):
    """Pure-JAX f32 transcription of HMLSTMOutput.forward (per-layer split form)."""
    wg, we, be, lin_ws, lin_bs, wo, bo = params
    B, T, _ = x.shape
    h = x.reshape(B * T, D_TOTAL)
    g = jax.nn.sigmoid(h @ wg)                                   # (N, L)
    s = jnp.zeros((B * T, EMBEDDING_SIZE), jnp.float32)
    off = 0
    for l, sz in enumerate(INPUT_SIZES):
        hl = h[:, off:off + sz]
        s = s + (hl * g[:, l:l + 1]) @ we[off:off + sz]
        off += sz
    s = s + be
    xact = jnp.maximum(s, 0.0)
    for w, b in zip(lin_ws, lin_bs):
        xact = jnp.tanh(xact @ w + b)
    out = xact @ wo + bo
    return out.reshape(B, T, OUTPUT_SIZE)


# ----------------------------------------------------------------------------
if __name__ == "__main__":
    key = jax.random.PRNGKey(0)
    key_x, key_p, key_x2 = jax.random.split(key, 3)

    params = make_params(key_p)

    # Small demo shape consistent with the module (N = 16 rows -> grid=(1,)).
    B, T = 2, 8
    x = jax.random.normal(key_x, (B, T, D_TOTAL), dtype=jnp.float32)
    out = jax.block_until_ready(hmlstm_output_forward(x, params))
    ref = reference_forward(x, params)
    assert out.shape == (B, T, OUTPUT_SIZE)
    assert jnp.allclose(out, ref, atol=3e-2, rtol=3e-2), \
        f"max abs err {jnp.max(jnp.abs(out - ref))}"

    # Larger shape exercising the tiled path (N = 8192 rows, TM = 1024, grid = 8).
    B2, T2 = 64, 128
    x2 = jax.random.normal(key_x2, (B2, T2, D_TOTAL), dtype=jnp.float32)
    out2 = jax.block_until_ready(hmlstm_output_forward(x2, params))
    ref2 = reference_forward(x2, params)
    assert out2.shape == (B2, T2, OUTPUT_SIZE)
    assert jnp.allclose(out2, ref2, atol=3e-2, rtol=3e-2), \
        f"max abs err {jnp.max(jnp.abs(out2 - ref2))}"

    print("KERNEL_OK")
</pallas_src>

<mosaic_0001>
module attributes {stable_mosaic.version = 11 : i64} {
  func.func @_hmlstm_output_kernel(%arg0: i32, %arg1: memref<16x128xf32, #tpu.memory_space<vmem>>, %arg2: memref<128x128xbf16, #tpu.memory_space<vmem>>, %arg3: memref<128x32xbf16, #tpu.memory_space<vmem>>, %arg4: memref<1x32xf32, #tpu.memory_space<vmem>>, %arg5: memref<32x64xbf16, #tpu.memory_space<vmem>>, %arg6: memref<1x64xf32, #tpu.memory_space<vmem>>, %arg7: memref<64x32xbf16, #tpu.memory_space<vmem>>, %arg8: memref<1x32xf32, #tpu.memory_space<vmem>>, %arg9: memref<32x16xbf16, #tpu.memory_space<vmem>>, %arg10: memref<1x16xf32, #tpu.memory_space<vmem>>, %arg11: memref<16x16xf32, #tpu.memory_space<vmem>>) attributes {dimension_semantics = [#tpu.dimension_semantics<parallel>], iteration_bounds = array<i64: 1>, scalar_prefetch = 0 : i64, scratch_operands = 0 : i64, tpu.core_type = #tpu.core_type<tc>, window_params = [{transform_indices = @transform_0, window_bounds = array<i64: 16, 128>}, {pipeline_mode = #tpu.pipeline_mode<synchronous>, transform_indices = @transform_1, window_bounds = array<i64: 128, 128>}, {pipeline_mode = #tpu.pipeline_mode<synchronous>, transform_indices = @transform_2, window_bounds = array<i64: 128, 32>}, {pipeline_mode = #tpu.pipeline_mode<synchronous>, transform_indices = @transform_3, window_bounds = array<i64: 1, 32>}, {pipeline_mode = #tpu.pipeline_mode<synchronous>, transform_indices = @transform_4, window_bounds = array<i64: 32, 64>}, {pipeline_mode = #tpu.pipeline_mode<synchronous>, transform_indices = @transform_5, window_bounds = array<i64: 1, 64>}, {pipeline_mode = #tpu.pipeline_mode<synchronous>, transform_indices = @transform_6, window_bounds = array<i64: 64, 32>}, {pipeline_mode = #tpu.pipeline_mode<synchronous>, transform_indices = @transform_7, window_bounds = array<i64: 1, 32>}, {pipeline_mode = #tpu.pipeline_mode<synchronous>, transform_indices = @transform_8, window_bounds = array<i64: 32, 16>}, {pipeline_mode = #tpu.pipeline_mode<synchronous>, transform_indices = @transform_9, window_bounds = array<i64: 1, 16>}, {transform_indices = @transform_10, window_bounds = array<i64: 16, 16>}]} {
    %c0 = arith.constant 0 : index
    %c0_0 = arith.constant 0 : index
    %0 = vector.load %arg1[%c0, %c0_0] : memref<16x128xf32, #tpu.memory_space<vmem>>, vector<16x128xf32>
    %1 = arith.truncf %0 : vector<16x128xf32> to vector<16x128xbf16>
    %c0_1 = arith.constant 0 : index
    %c0_2 = arith.constant 0 : index
    %2 = vector.load %arg2[%c0_1, %c0_2] : memref<128x128xbf16, #tpu.memory_space<vmem>>, vector<128x128xbf16>
    %cst = arith.constant dense<0.000000e+00> : vector<16x128xf32>
    %3 = tpu.matmul %1, %2, %cst {dimension_numbers = #tpu.dot_dimension_numbers<[1], [0], [0], [1], [0, 0, 1, 1], [], []>} : vector<16x128xbf16>, vector<128x128xbf16>, vector<16x128xf32> -> vector<16x128xf32>
    %4 = arith.negf %3 : vector<16x128xf32>
    %5 = math.exp %4 : vector<16x128xf32>
    %cst_3 = arith.constant 1.000000e+00 : f32
    %6 = vector.broadcast %cst_3 : f32 to vector<16x128xf32>
    %7 = arith.addf %6, %5 : vector<16x128xf32>
    %8 = arith.divf %6, %7 : vector<16x128xf32>
    %9 = arith.mulf %0, %8 : vector<16x128xf32>
    %10 = arith.truncf %9 : vector<16x128xf32> to vector<16x128xbf16>
    %c0_4 = arith.constant 0 : index
    %c0_5 = arith.constant 0 : index
    %11 = vector.load %arg3[%c0_4, %c0_5] : memref<128x32xbf16, #tpu.memory_space<vmem>>, vector<128x32xbf16>
    %cst_6 = arith.constant dense<0.000000e+00> : vector<16x32xf32>
    %12 = tpu.matmul %10, %11, %cst_6 {dimension_numbers = #tpu.dot_dimension_numbers<[1], [0], [0], [1], [0, 0, 1, 1], [], []>} : vector<16x128xbf16>, vector<128x32xbf16>, vector<16x32xf32> -> vector<16x32xf32>
    %c0_7 = arith.constant 0 : index
    %c0_8 = arith.constant 0 : index
    %13 = vector.load %arg4[%c0_7, %c0_8] : memref<1x32xf32, #tpu.memory_space<vmem>>, vector<1x32xf32>
    %14 = vector.broadcast %13 : vector<1x32xf32> to vector<16x32xf32>
    %15 = arith.addf %12, %14 : vector<16x32xf32>
    %cst_9 = arith.constant 0.000000e+00 : f32
    %16 = vector.broadcast %cst_9 : f32 to vector<16x32xf32>
    %17 = arith.maximumf %15, %16 : vector<16x32xf32>
    %c0_10 = arith.constant 0 : index
    %c0_11 = arith.constant 0 : index
    %18 = vector.load %arg5[%c0_10, %c0_11] : memref<32x64xbf16, #tpu.memory_space<vmem>>, vector<32x64xbf16>
    %c0_12 = arith.constant 0 : index
    %c0_13 = arith.constant 0 : index
    %19 = vector.load %arg6[%c0_12, %c0_13] : memref<1x64xf32, #tpu.memory_space<vmem>>, vector<1x64xf32>
    %20 = arith.truncf %17 : vector<16x32xf32> to vector<16x32xbf16>
    %cst_14 = arith.constant dense<0.000000e+00> : vector<16x64xf32>
    %21 = tpu.matmul %20, %18, %cst_14 {dimension_numbers = #tpu.dot_dimension_numbers<[1], [0], [0], [1], [0, 0, 1, 1], [], []>} : vector<16x32xbf16>, vector<32x64xbf16>, vector<16x64xf32> -> vector<16x64xf32>
    %22 = vector.broadcast %19 : vector<1x64xf32> to vector<16x64xf32>
    %23 = arith.addf %21, %22 : vector<16x64xf32>
    %24 = math.tanh %23 : vector<16x64xf32>
    %c0_15 = arith.constant 0 : index
    %c0_16 = arith.constant 0 : index
    %25 = vector.load %arg7[%c0_15, %c0_16] : memref<64x32xbf16, #tpu.memory_space<vmem>>, vector<64x32xbf16>
    %c0_17 = arith.constant 0 : index
    %c0_18 = arith.constant 0 : index
    %26 = vector.load %arg8[%c0_17, %c0_18] : memref<1x32xf32, #tpu.memory_space<vmem>>, vector<1x32xf32>
    %27 = arith.truncf %24 : vector<16x64xf32> to vector<16x64xbf16>
    %cst_19 = arith.constant dense<0.000000e+00> : vector<16x32xf32>
    %28 = tpu.matmul %27, %25, %cst_19 {dimension_numbers = #tpu.dot_dimension_numbers<[1], [0], [0], [1], [0, 0, 1, 1], [], []>} : vector<16x64xbf16>, vector<64x32xbf16>, vector<16x32xf32> -> vector<16x32xf32>
    %29 = vector.broadcast %26 : vector<1x32xf32> to vector<16x32xf32>
    %30 = arith.addf %28, %29 : vector<16x32xf32>
    %31 = math.tanh %30 : vector<16x32xf32>
    %32 = arith.truncf %31 : vector<16x32xf32> to vector<16x32xbf16>
    %c0_20 = arith.constant 0 : index
    %c0_21 = arith.constant 0 : index
    %33 = vector.load %arg9[%c0_20, %c0_21] : memref<32x16xbf16, #tpu.memory_space<vmem>>, vector<32x16xbf16>
    %cst_22 = arith.constant dense<0.000000e+00> : vector<16x16xf32>
    %34 = tpu.matmul %32, %33, %cst_22 {dimension_numbers = #tpu.dot_dimension_numbers<[1], [0], [0], [1], [0, 0, 1, 1], [], []>} : vector<16x32xbf16>, vector<32x16xbf16>, vector<16x16xf32> -> vector<16x16xf32>
    %c0_23 = arith.constant 0 : index
    %c0_24 = arith.constant 0 : index
    %35 = vector.load %arg10[%c0_23, %c0_24] : memref<1x16xf32, #tpu.memory_space<vmem>>, vector<1x16xf32>
    %36 = vector.broadcast %35 : vector<1x16xf32> to vector<16x16xf32>
    %37 = arith.addf %34, %36 : vector<16x16xf32>
    %c0_25 = arith.constant 0 : index
    %c0_26 = arith.constant 0 : index
    %38 = vector.load %arg11[%c0_25, %c0_26] : memref<16x16xf32, #tpu.memory_space<vmem>>, vector<16x16xf32>
    tpu.vector_store %arg11[%c0_25, %c0_26], %37 {strides = array<i32>} : memref<16x16xf32, #tpu.memory_space<vmem>>, vector<16x16xf32>,
    return
  }
  func.func @transform_0(%arg0: i32) -> (i32, i32) {
    %c0_i32 = arith.constant 0 : i32
    %c0_i32_0 = arith.constant 0 : i32
    return %arg0, %c0_i32 : i32, i32
  }
  func.func @transform_1(%arg0: i32) -> (i32, i32) {
    %c0_i32 = arith.constant 0 : i32
    %c0_i32_0 = arith.constant 0 : i32
    %c0_i32_1 = arith.constant 0 : i32
    return %c0_i32, %c0_i32_0 : i32, i32
  }
  func.func @transform_2(%arg0: i32) -> (i32, i32) {
    %c0_i32 = arith.constant 0 : i32
    %c0_i32_0 = arith.constant 0 : i32
    %c0_i32_1 = arith.constant 0 : i32
    return %c0_i32, %c0_i32_0 : i32, i32
  }
  func.func @transform_3(%arg0: i32) -> (i32, i32) {
    %c0_i32 = arith.constant 0 : i32
    %c0_i32_0 = arith.constant 0 : i32
    %c0_i32_1 = arith.constant 0 : i32
    return %c0_i32, %c0_i32_0 : i32, i32
  }
  func.func @transform_4(%arg0: i32) -> (i32, i32) {
    %c0_i32 = arith.constant 0 : i32
    %c0_i32_0 = arith.constant 0 : i32
    %c0_i32_1 = arith.constant 0 : i32
    return %c0_i32, %c0_i32_0 : i32, i32
  }
  func.func @transform_5(%arg0: i32) -> (i32, i32) {
    %c0_i32 = arith.constant 0 : i32
    %c0_i32_0 = arith.constant 0 : i32
    %c0_i32_1 = arith.constant 0 : i32
    return %c0_i32, %c0_i32_0 : i32, i32
  }
  func.func @transform_6(%arg0: i32) -> (i32, i32) {
    %c0_i32 = arith.constant 0 : i32
    %c0_i32_0 = arith.constant 0 : i32
    %c0_i32_1 = arith.constant 0 : i32
    return %c0_i32, %c0_i32_0 : i32, i32
  }
  func.func @transform_7(%arg0: i32) -> (i32, i32) {
    %c0_i32 = arith.constant 0 : i32
    %c0_i32_0 = arith.constant 0 : i32
    %c0_i32_1 = arith.constant 0 : i32
    return %c0_i32, %c0_i32_0 : i32, i32
  }
  func.func @transform_8(%arg0: i32) -> (i32, i32) {
    %c0_i32 = arith.constant 0 : i32
    %c0_i32_0 = arith.constant 0 : i32
    %c0_i32_1 = arith.constant 0 : i32
    return %c0_i32, %c0_i32_0 : i32, i32
  }
  func.func @transform_9(%arg0: i32) -> (i32, i32) {
    %c0_i32 = arith.constant 0 : i32
    %c0_i32_0 = arith.constant 0 : i32
    %c0_i32_1 = arith.constant 0 : i32
    return %c0_i32, %c0_i32_0 : i32, i32
  }
  func.func @transform_10(%arg0: i32) -> (i32, i32) {
    %c0_i32 = arith.constant 0 : i32
    %c0_i32_0 = arith.constant 0 : i32
    return %arg0, %c0_i32 : i32, i32
  }
}

</mosaic_0001>

<llo_original>
// kernel: tpu_custom_call.1
$region0: #{tpu_custom_call.1}
  #allocation0 [shape = 'u32[]', space=smem, size = 0x4, offset = 0x4, fixed_abs, tag = 'smem constant byte address 0x4 - core index']
  #allocation1 [shape = 'u32[144,128]{1,0:T(1,128)}', space=vmem, size = 0x12000, scoped, tag = 'internal scratch']
  %s0 = inlined_call_operand.vmem [shape: f32[16,128], index: 0, kind: input, shape index: {}]
  %s1 = inlined_call_operand.vmem [shape: bf16[128,128], index: 1, kind: input, shape index: {}]
  %s2 = inlined_call_operand.vmem [shape: bf16[128,32], index: 2, kind: input, shape index: {}]
  %s3 = inlined_call_operand.vmem [shape: f32[1,32], index: 3, kind: input, shape index: {}]
  %s4 = inlined_call_operand.vmem [shape: bf16[32,64], index: 4, kind: input, shape index: {}]
  %s5 = inlined_call_operand.vmem [shape: f32[1,64], index: 5, kind: input, shape index: {}]
  %s6 = inlined_call_operand.vmem [shape: bf16[64,32], index: 6, kind: input, shape index: {}]
  %s7 = inlined_call_operand.vmem [shape: f32[1,32], index: 7, kind: input, shape index: {}]
  %s8 = inlined_call_operand.vmem [shape: bf16[32,16], index: 8, kind: input, shape index: {}]
  %s9 = inlined_call_operand.vmem [shape: f32[1,16], index: 9, kind: input, shape index: {}]
  %s10 = inlined_call_operand.hbm [shape: f32[16,16], index: 10, kind: output, shape index: {}]
  %s11 = sld [smem:[#allocation0]]
  $region50: #{tpu_custom_call.1} parent=0
    _
  %s13 = ssub.s32 1, %s11
  %s14 = scalar_select 0, %s13, %s11
  $region1: #{tpu_custom_call.1} parent=0
    #allocation2 [shape = 'u8[8192]{0}', space=vmem, size = 0x2000, scoped, tag = 'output window, operand 0, single buffered']
    #allocation3 [shape = 's32[1]{0}', space=sflag, size = 0x4, scoped, tag = 'scoped memory for tpu_custom_call.1']
    %15 = vsyncpa [#allocation3], 0
    // Predicated region
    $region2: #{tpu_custom_call.1} parent=1 // pred_check
      _
    $region3: #{tpu_custom_call.1} parent=1 // pred_check_branch
      %17 = sbr.rel (0) target = $region5
    $region4: #{tpu_custom_call.1} parent=1 // pred_region
      _
    $region5: #{tpu_custom_call.1} parent=1 // pred_fallthru
      _
    // Predicated region
    $region6: #{tpu_custom_call.1} parent=1 // pred_check
      _
    $region7: #{tpu_custom_call.1} parent=1 // pred_check_branch
      %19 = sbr.rel (0) target = $region9
    $region8: #{tpu_custom_call.1} parent=1 // pred_region
      _
    $region9: #{tpu_custom_call.1} parent=1 // pred_fallthru
      _
    // Predicated region
    $region10: #{tpu_custom_call.1} parent=1 // pred_check
      _
    $region11: #{tpu_custom_call.1} parent=1 // pred_check_branch
      %21 = sbr.rel (0) target = $region13
    $region12: #{tpu_custom_call.1} parent=1 // pred_region
      _
    $region13: #{tpu_custom_call.1} parent=1 // pred_fallthru
      _
    // Predicated region
    $region14: #{tpu_custom_call.1} parent=1 // pred_check
      _
    $region15: #{tpu_custom_call.1} parent=1 // pred_check_branch
      %23 = sbr.rel (0) target = $region17
    $region16: #{tpu_custom_call.1} parent=1 // pred_region
      _
    $region17: #{tpu_custom_call.1} parent=1 // pred_fallthru
      _
    // Predicated region
    $region18: #{tpu_custom_call.1} parent=1 // pred_check
      _
    $region19: #{tpu_custom_call.1} parent=1 // pred_check_branch
      %25 = sbr.rel (0) target = $region21
    $region20: #{tpu_custom_call.1} parent=1 // pred_region
      _
    $region21: #{tpu_custom_call.1} parent=1 // pred_fallthru
      _
    // Predicated region
    $region22: #{tpu_custom_call.1} parent=1 // pred_check
      _
    $region23: #{tpu_custom_call.1} parent=1 // pred_check_branch
      %27 = sbr.rel (0) target = $region25
    $region24: #{tpu_custom_call.1} parent=1 // pred_region
      _
    $region25: #{tpu_custom_call.1} parent=1 // pred_fallthru
      _
    // Predicated region
    $region26: #{tpu_custom_call.1} parent=1 // pred_check
      _
    $region27: #{tpu_custom_call.1} parent=1 // pred_check_branch
      %29 = sbr.rel (0) target = $region29
    $region28: #{tpu_custom_call.1} parent=1 // pred_region
      _
    $region29: #{tpu_custom_call.1} parent=1 // pred_fallthru
      _
    // Predicated region
    $region30: #{tpu_custom_call.1} parent=1 // pred_check
      _
    $region31: #{tpu_custom_call.1} parent=1 // pred_check_branch
      %31 = sbr.rel (0) target = $region33
    $region32: #{tpu_custom_call.1} parent=1 // pred_region
      _
    $region33: #{tpu_custom_call.1} parent=1 // pred_fallthru
      _
    // Predicated region
    $region34: #{tpu_custom_call.1} parent=1 // pred_check
      _
    $region35: #{tpu_custom_call.1} parent=1 // pred_check_branch
      %33 = sbr.rel (0) target = $region37
    $region36: #{tpu_custom_call.1} parent=1 // pred_region
      _
    $region37: #{tpu_custom_call.1} parent=1 // pred_fallthru
      _
    // Predicated region
    $region38: #{tpu_custom_call.1} parent=1 // pred_check
      _
    $region39: #{tpu_custom_call.1} parent=1 // pred_check_branch
      %35 = sbr.rel (0) target = $region41
    $region40: #{tpu_custom_call.1} parent=1 // pred_region
      _
    $region41: #{tpu_custom_call.1} parent=1 // pred_fallthru
      _
    %v37 = vld [vmem:[%s0] sm:$0xff]
    %v38 = vld [vmem:[%s0 + $0x8] sm:$0xff]
    %v39 = vpack.c.bf16 %v38, %v37
    %v40 = vld [vmem:[%s1] sm:$0xf]
    %v41 = vld [vmem:[%s1 + $0x4] sm:$0xf]
    %v42 = vld [vmem:[%s1 + $0x8] sm:$0xf]
    %v43 = vld [vmem:[%s1 + $0xc] sm:$0xf]
    %v44 = vld [vmem:[%s1 + $0x10] sm:$0xf]
    %v45 = vld [vmem:[%s1 + $0x14] sm:$0xf]
    %v46 = vld [vmem:[%s1 + $0x18] sm:$0xf]
    %v47 = vld [vmem:[%s1 + $0x1c] sm:$0xf]
    %v48 = vld [vmem:[%s1 + $0x20] sm:$0xf]
    %v49 = vld [vmem:[%s1 + $0x24] sm:$0xf]
    %v50 = vld [vmem:[%s1 + $0x28] sm:$0xf]
    %v51 = vld [vmem:[%s1 + $0x2c] sm:$0xf]
    %v52 = vld [vmem:[%s1 + $0x30] sm:$0xf]
    %v53 = vld [vmem:[%s1 + $0x34] sm:$0xf]
    %v54 = vld [vmem:[%s1 + $0x38] sm:$0xf]
    %v55 = vld [vmem:[%s1 + $0x3c] sm:$0xf]
    %v72 = vunpack.c.l.b16 %v40
    %v73 = vunpack.c.l.b16 %v41
    %v74 = vunpack.c.l.b16 %v42
    %v75 = vunpack.c.l.b16 %v43
    %v76 = vunpack.c.l.b16 %v44
    %v77 = vunpack.c.l.b16 %v45
    %v78 = vunpack.c.l.b16 %v46
    %v79 = vunpack.c.l.b16 %v47
    %v80 = vunpack.c.l.b16 %v48
    %v81 = vunpack.c.l.b16 %v49
    %v82 = vunpack.c.l.b16 %v50
    %v83 = vunpack.c.l.b16 %v51
    %v84 = vunpack.c.l.b16 %v52
    %v85 = vunpack.c.l.b16 %v53
    %v86 = vunpack.c.l.b16 %v54
    %v87 = vunpack.c.l.b16 %v55
    %v88 = vpack.c.b16 %v73, %v72
    %v89 = vpack.c.b16 %v75, %v74
    %v90 = vpack.c.b16 %v77, %v76
    %v91 = vpack.c.b16 %v79, %v78
    %v92 = vpack.c.b16 %v81, %v80
    %v93 = vpack.c.b16 %v83, %v82
    %v94 = vpack.c.b16 %v85, %v84
    %v95 = vpack.c.b16 %v87, %v86
    %104 = vmatprep.subr.bf16.mxu0 0
    %105 = vmatpush1.bf16.msra.mxu0 %v95
    %106 = vmatprep.subr.bf16.mxu0 0
    %107 = vmatpush1.bf16.msra.mxu0 %v94
    %108 = vmatprep.subr.bf16.mxu0 0
    %109 = vmatpush1.bf16.msra.mxu0 %v93
    %110 = vmatprep.subr.bf16.mxu0 0
    %111 = vmatpush1.bf16.msra.mxu0 %v92
    %112 = vmatprep.subr.bf16.mxu0 0
    %113 = vmatpush1.bf16.msra.mxu0 %v91
    %114 = vmatprep.subr.bf16.mxu0 0
    %115 = vmatpush1.bf16.msra.mxu0 %v90
    %116 = vmatprep.subr.bf16.mxu0 0
    %117 = vmatpush1.bf16.msra.mxu0 %v89
    %118 = vmatprep.subr.bf16.mxu0 0
    %119 = vmatpush1.bf16.msra.mxu0 %v88
    %120 = vmatprep.subr.bf16.mxu0 0
    %121 = vmatpush2.bf16.msra.mxu0 0
    %122 = vmatprep.subr.bf16.mxu0 0
    %123 = vmatpush2.bf16.msra.mxu0 0
    %124 = vmatprep.subr.bf16.mxu0 0
    %125 = vmatpush2.bf16.msra.mxu0 0
    %126 = vmatprep.subr.bf16.mxu0 0
    %127 = vmatpush2.bf16.msra.mxu0 0
    %128 = vmatprep.subr.bf16.mxu0 0
    %129 = vmatpush2.bf16.msra.mxu0 0
    %130 = vmatprep.subr.bf16.mxu0 0
    %131 = vmatpush2.bf16.msra.mxu0 0
    %132 = vmatprep.subr.bf16.mxu0 0
    %133 = vmatpush2.bf16.msra.mxu0 0
    %134 = vmatprep.subr.bf16.mxu0 0
    %135 = vmatpush2.bf16.msra.mxu0 0
    %136 = vmatprep.mubr.bf16.mxu0 0
    %137 = vmatmul.mubr.bf16.gmra.mxu0 %v39
    %v138 = vpop.f32.mrf.mxu0
    %v139 = vadd.f32 0.0, %v138
    %v140 = vpop.f32.mrf.mxu0
    %v141 = vpop.f32.mrf.mxu0
    %v142 = vadd.f32 0.0, %v141
    %v143 = vpop.f32.mrf.mxu0
    %144 = vdwg.mxu0
    %v145 = vxor.u32 %v139, 2147483648
    %v146 = vxor.u32 %v142, 2147483648
    %v147 = vmul.f32 %v145, 1.442695
    %v148 = vpow.pop %v147
    %v149 = vmul.f32 %v146, 1.442695
    %v150 = vpow.pop %v149
    %v151 = vadd.f32 %v148, 1.0
    %v152 = vadd.f32 %v150, 1.0
    %v153 = vrcp.pop %v151
    %v154 = vmul.f32 1.0, %v153
    %v155 = vrcp.pop %v152
    %v156 = vmul.f32 1.0, %v155
    %v157 = vmul.f32 %v37, %v154
    %v158 = vmul.f32 %v38, %v156
    %v159 = vpack.c.bf16 %v158, %v157
    %v160 = vld [vmem:[%s2] sm:$0xf]
    %v161 = vld [vmem:[%s2 + $0x4] sm:$0xf]
    %v162 = vld [vmem:[%s2 + $0x8] sm:$0xf]
    %v163 = vld [vmem:[%s2 + $0xc] sm:$0xf]
    %v164 = vld [vmem:[%s2 + $0x10] sm:$0xf]
    %v165 = vld [vmem:[%s2 + $0x14] sm:$0xf]
    %v166 = vld [vmem:[%s2 + $0x18] sm:$0xf]
    %v167 = vld [vmem:[%s2 + $0x1c] sm:$0xf]
    %v168 = vld [vmem:[%s2 + $0x20] sm:$0xf]
    %v169 = vld [vmem:[%s2 + $0x24] sm:$0xf]
    %v170 = vld [vmem:[%s2 + $0x28] sm:$0xf]
    %v171 = vld [vmem:[%s2 + $0x2c] sm:$0xf]
    %v172 = vld [vmem:[%s2 + $0x30] sm:$0xf]
    %v173 = vld [vmem:[%s2 + $0x34] sm:$0xf]
    %v174 = vld [vmem:[%s2 + $0x38] sm:$0xf]
    %v175 = vld [vmem:[%s2 + $0x3c] sm:$0xf]
    %v176 = vld [vmem:[%s3] sm:$0x1]
    %v178 = vlaneseq
    %v179 = vshrl.u32 %v178, 7
    %v180 = vsub.s32 0, %v179
    %v181 = vrot.slane %v176, %v180
    %v199 = vunpack.c.l.b16 %v160
    %v200 = vunpack.c.l.b16 %v161
    %v201 = vunpack.c.l.b16 %v162
    %v202 = vunpack.c.l.b16 %v163
    %v203 = vunpack.c.l.b16 %v164
    %v204 = vunpack.c.l.b16 %v165
    %v205 = vunpack.c.l.b16 %v166
    %v206 = vunpack.c.l.b16 %v167
    %v207 = vunpack.c.l.b16 %v168
    %v208 = vunpack.c.l.b16 %v169
    %v209 = vunpack.c.l.b16 %v170
    %v210 = vunpack.c.l.b16 %v171
    %v211 = vunpack.c.l.b16 %v172
    %v212 = vunpack.c.l.b16 %v173
    %v213 = vunpack.c.l.b16 %v174
    %v214 = vunpack.c.l.b16 %v175
    %v215 = vpack.c.b16 %v200, %v199
    %v216 = vpack.c.b16 %v202, %v201
    %v217 = vpack.c.b16 %v204, %v203
    %v218 = vpack.c.b16 %v206, %v205
    %v219 = vpack.c.b16 %v208, %v207
    %v220 = vpack.c.b16 %v210, %v209
    %v221 = vpack.c.b16 %v212, %v211
    %v222 = vpack.c.b16 %v214, %v213
    %231 = vmatprep.subr.bf16.mxu0 0
    %232 = vmatpush1.bf16.msra.mxu0 %v222
    %233 = vmatprep.subr.bf16.mxu0 0
    %234 = vmatpush1.bf16.msra.mxu0 %v221
    %235 = vmatprep.subr.bf16.mxu0 0
    %236 = vmatpush1.bf16.msra.mxu0 %v220
    %237 = vmatprep.subr.bf16.mxu0 0
    %238 = vmatpush1.bf16.msra.mxu0 %v219
    %239 = vmatprep.subr.bf16.mxu0 0
    %240 = vmatpush1.bf16.msra.mxu0 %v218
    %241 = vmatprep.subr.bf16.mxu0 0
    %242 = vmatpush1.bf16.msra.mxu0 %v217
    %243 = vmatprep.subr.bf16.mxu0 0
    %244 = vmatpush1.bf16.msra.mxu0 %v216
    %245 = vmatprep.subr.bf16.mxu0 0
    %246 = vmatpush1.bf16.msra.mxu0 %v215
    %247 = vmatprep.subr.bf16.mxu0 0
    %248 = vmatpush2.bf16.msra.mxu0 0
    %249 = vmatprep.subr.bf16.mxu0 0
    %250 = vmatpush2.bf16.msra.mxu0 0
    %251 = vmatprep.subr.bf16.mxu0 0
    %252 = vmatpush2.bf16.msra.mxu0 0
    %253 = vmatprep.subr.bf16.mxu0 0
    %254 = vmatpush2.bf16.msra.mxu0 0
    %255 = vmatprep.subr.bf16.mxu0 0
    %256 = vmatpush2.bf16.msra.mxu0 0
    %257 = vmatprep.subr.bf16.mxu0 0
    %258 = vmatpush2.bf16.msra.mxu0 0
    %259 = vmatprep.subr.bf16.mxu0 0
    %260 = vmatpush2.bf16.msra.mxu0 0
    %261 = vmatprep.subr.bf16.mxu0 0
    %262 = vmatpush2.bf16.msra.mxu0 0
    %263 = vmatprep.mubr.bf16.mxu0 0
    %264 = vmatmul.mubr.bf16.gmra.mxu0 %v159
    %v265 = vpop.f32.mrf.mxu0
    %v266 = vadd.f32 %v181, %v265
    %v267 = vpop.f32.mrf.mxu0
    %v268 = vpop.f32.mrf.mxu0
    %v269 = vadd.f32 %v181, %v268
    %v270 = vpop.f32.mrf.mxu0
    %271 = vdwg.mxu0
    %v272 = vmax.f32 %v266, 0.0
    %v273 = vmax.f32 %v269, 0.0
    %v274 = vld [vmem:[%s4] sm:$0xf]
    %v275 = vld [vmem:[%s4 + $0x4] sm:$0xf]
    %v276 = vld [vmem:[%s4 + $0x8] sm:$0xf]
    %v277 = vld [vmem:[%s4 + $0xc] sm:$0xf]
    %v278 = vld [vmem:[%s5] sm:$0x1]
    %v279 = vpack.c.bf16 %v273, %v272
    %v281 = vlaneseq
    %v282 = vshrl.u32 %v281, 7
    %v283 = vsub.s32 0, %v282
    %v284 = vrot.slane %v278, %v283
    %v290 = vunpack.c.l.b16 %v274
    %v291 = vunpack.c.l.b16 %v275
    %v292 = vunpack.c.l.b16 %v276
    %v293 = vunpack.c.l.b16 %v277
    %v294 = vpack.c.b16 %v291, %v290
    %v295 = vpack.c.b16 %v293, %v292
    %vm298 = vcmask 261120
    %v300 = vsel %vm298, %v279, 0
    %302 = vmatprep.subr.bf16.mxu0 0
    %303 = vmatpush1.bf16.msra.mxu0 0
    %304 = vmatprep.subr.bf16.mxu0 0
    %305 = vmatpush1.bf16.msra.mxu0 0
    %306 = vmatprep.subr.bf16.mxu0 0
    %307 = vmatpush1.bf16.msra.mxu0 0
    %308 = vmatprep.subr.bf16.mxu0 0
    %309 = vmatpush1.bf16.msra.mxu0 0
    %310 = vmatprep.subr.bf16.mxu0 0
    %311 = vmatpush1.bf16.msra.mxu0 0
    %312 = vmatprep.subr.bf16.mxu0 0
    %313 = vmatpush1.bf16.msra.mxu0 0
    %314 = vmatprep.subr.bf16.mxu0 0
    %315 = vmatpush1.bf16.msra.mxu0 %v295
    %316 = vmatprep.subr.bf16.mxu0 0
    %317 = vmatpush1.bf16.msra.mxu0 %v294
    %318 = vmatprep.subr.bf16.mxu0 0
    %319 = vmatpush2.bf16.msra.mxu0 0
    %320 = vmatprep.subr.bf16.mxu0 0
    %321 = vmatpush2.bf16.msra.mxu0 0
    %322 = vmatprep.subr.bf16.mxu0 0
    %323 = vmatpush2.bf16.msra.mxu0 0
    %324 = vmatprep.subr.bf16.mxu0 0
    %325 = vmatpush2.bf16.msra.mxu0 0
    %326 = vmatprep.subr.bf16.mxu0 0
    %327 = vmatpush2.bf16.msra.mxu0 0
    %328 = vmatprep.subr.bf16.mxu0 0
    %329 = vmatpush2.bf16.msra.mxu0 0
    %330 = vmatprep.subr.bf16.mxu0 0
    %331 = vmatpush2.bf16.msra.mxu0 0
    %332 = vmatprep.subr.bf16.mxu0 0
    %333 = vmatpush2.bf16.msra.mxu0 0
    %334 = vmatprep.mubr.bf16.mxu0 0
    %335 = vmatmul.mubr.bf16.gmra.mxu0 %v300
    %v336 = vpop.f32.mrf.mxu0
    %v337 = vadd.f32 %v284, %v336
    %v338 = vpop.f32.mrf.mxu0
    %v339 = vpop.f32.mrf.mxu0
    %v340 = vadd.f32 %v284, %v339
    %v341 = vpop.f32.mrf.mxu0
    %342 = vdwg.mxu0
    %v343 = vtanh.pop %v337
    %v344 = vtanh.pop %v340
    %v345 = vld [vmem:[%s6] sm:$0xf]
    %v346 = vld [vmem:[%s6 + $0x4] sm:$0xf]
    %v347 = vld [vmem:[%s6 + $0x8] sm:$0xf]
    %v348 = vld [vmem:[%s6 + $0xc] sm:$0xf]
    %v349 = vld [vmem:[%s6 + $0x10] sm:$0xf]
    %v350 = vld [vmem:[%s6 + $0x14] sm:$0xf]
    %v351 = vld [vmem:[%s6 + $0x18] sm:$0xf]
    %v352 = vld [vmem:[%s6 + $0x1c] sm:$0xf]
    %v353 = vld [vmem:[%s7] sm:$0x1]
    %v354 = vpack.c.bf16 %v344, %v343
    %v356 = vlaneseq
    %v357 = vshrl.u32 %v356, 7
    %v358 = vsub.s32 0, %v357
    %v359 = vrot.slane %v353, %v358
    %v369 = vunpack.c.l.b16 %v345
    %v370 = vunpack.c.l.b16 %v346
    %v371 = vunpack.c.l.b16 %v347
    %v372 = vunpack.c.l.b16 %v348
    %v373 = vunpack.c.l.b16 %v349
    %v374 = vunpack.c.l.b16 %v350
    %v375 = vunpack.c.l.b16 %v351
    %v376 = vunpack.c.l.b16 %v352
    %v377 = vpack.c.b16 %v370, %v369
    %v378 = vpack.c.b16 %v372, %v371
    %v379 = vpack.c.b16 %v374, %v373
    %v380 = vpack.c.b16 %v376, %v375
    %vm385 = vcmask 523264
    %v387 = vsel %vm385, %v354, 0
    %389 = vmatprep.subr.bf16.mxu0 0
    %390 = vmatpush1.bf16.msra.mxu0 0
    %391 = vmatprep.subr.bf16.mxu0 0
    %392 = vmatpush1.bf16.msra.mxu0 0
    %393 = vmatprep.subr.bf16.mxu0 0
    %394 = vmatpush1.bf16.msra.mxu0 0
    %395 = vmatprep.subr.bf16.mxu0 0
    %396 = vmatpush1.bf16.msra.mxu0 0
    %397 = vmatprep.subr.bf16.mxu0 0
    %398 = vmatpush1.bf16.msra.mxu0 %v380
    %399 = vmatprep.subr.bf16.mxu0 0
    %400 = vmatpush1.bf16.msra.mxu0 %v379
    %401 = vmatprep.subr.bf16.mxu0 0
    %402 = vmatpush1.bf16.msra.mxu0 %v378
    %403 = vmatprep.subr.bf16.mxu0 0
    %404 = vmatpush1.bf16.msra.mxu0 %v377
    %405 = vmatprep.subr.bf16.mxu0 0
    %406 = vmatpush2.bf16.msra.mxu0 0
    %407 = vmatprep.subr.bf16.mxu0 0
    %408 = vmatpush2.bf16.msra.mxu0 0
    %409 = vmatprep.subr.bf16.mxu0 0
    %410 = vmatpush2.bf16.msra.mxu0 0
    %411 = vmatprep.subr.bf16.mxu0 0
    %412 = vmatpush2.bf16.msra.mxu0 0
    %413 = vmatprep.subr.bf16.mxu0 0
    %414 = vmatpush2.bf16.msra.mxu0 0
    %415 = vmatprep.subr.bf16.mxu0 0
    %416 = vmatpush2.bf16.msra.mxu0 0
    %417 = vmatprep.subr.bf16.mxu0 0
    %418 = vmatpush2.bf16.msra.mxu0 0
    %419 = vmatprep.subr.bf16.mxu0 0
    %420 = vmatpush2.bf16.msra.mxu0 0
    %421 = vmatprep.mubr.bf16.mxu0 0
    %422 = vmatmul.mubr.bf16.gmra.mxu0 %v387
    %v423 = vpop.f32.mrf.mxu0
    %v424 = vadd.f32 %v359, %v423
    %v425 = vpop.f32.mrf.mxu0
    %v426 = vpop.f32.mrf.mxu0
    %v427 = vadd.f32 %v359, %v426
    %v428 = vpop.f32.mrf.mxu0
    %429 = vdwg.mxu0
    %v430 = vtanh.pop %v424
    %v431 = vtanh.pop %v427
    %v432 = vpack.c.bf16 %v431, %v430
    %v433 = vld [vmem:[%s8] sm:$0xf]
    %v434 = vld [vmem:[%s8 + $0x4] sm:$0xf]
    %v435 = vld [vmem:[%s8 + $0x8] sm:$0xf]
    %v436 = vld [vmem:[%s8 + $0xc] sm:$0xf]
    %v437 = vld [vmem:[%s9] sm:$0x1]
    %v439 = vlaneseq
    %v440 = vshrl.u32 %v439, 7
    %v441 = vsub.s32 0, %v440
    %v442 = vrot.slane %v437, %v441
    %v448 = vunpack.c.l.b16 %v433
    %v449 = vunpack.c.l.b16 %v434
    %v450 = vunpack.c.l.b16 %v435
    %v451 = vunpack.c.l.b16 %v436
    %v452 = vpack.c.b16 %v449, %v448
    %v453 = vpack.c.b16 %v451, %v450
    %v457 = vsel %vm298, %v432, 0
    %459 = vmatprep.subr.bf16.mxu0 0
    %460 = vmatpush1.bf16.msra.mxu0 0
    %461 = vmatprep.subr.bf16.mxu0 0
    %462 = vmatpush1.bf16.msra.mxu0 0
    %463 = vmatprep.subr.bf16.mxu0 0
    %464 = vmatpush1.bf16.msra.mxu0 0
    %465 = vmatprep.subr.bf16.mxu0 0
    %466 = vmatpush1.bf16.msra.mxu0 0
    %467 = vmatprep.subr.bf16.mxu0 0
    %468 = vmatpush1.bf16.msra.mxu0 0
    %469 = vmatprep.subr.bf16.mxu0 0
    %470 = vmatpush1.bf16.msra.mxu0 0
    %471 = vmatprep.subr.bf16.mxu0 0
    %472 = vmatpush1.bf16.msra.mxu0 %v453
    %473 = vmatprep.subr.bf16.mxu0 0
    %474 = vmatpush1.bf16.msra.mxu0 %v452
    %475 = vmatprep.subr.bf16.mxu0 0
    %476 = vmatpush2.bf16.msra.mxu0 0
    %477 = vmatprep.subr.bf16.mxu0 0
    %478 = vmatpush2.bf16.msra.mxu0 0
    %479 = vmatprep.subr.bf16.mxu0 0
    %480 = vmatpush2.bf16.msra.mxu0 0
    %481 = vmatprep.subr.bf16.mxu0 0
    %482 = vmatpush2.bf16.msra.mxu0 0
    %483 = vmatprep.subr.bf16.mxu0 0
    %484 = vmatpush2.bf16.msra.mxu0 0
    %485 = vmatprep.subr.bf16.mxu0 0
    %486 = vmatpush2.bf16.msra.mxu0 0
    %487 = vmatprep.subr.bf16.mxu0 0
    %488 = vmatpush2.bf16.msra.mxu0 0
    %489 = vmatprep.subr.bf16.mxu0 0
    %490 = vmatpush2.bf16.msra.mxu0 0
    %491 = vmatprep.mubr.bf16.mxu0 0
    %492 = vmatmul.mubr.bf16.gmra.mxu0 %v457
    %v493 = vpop.f32.mrf.mxu0
    %v494 = vadd.f32 %v442, %v493
    %v495 = vpop.f32.mrf.mxu0
    %v496 = vpop.f32.mrf.mxu0
    %v497 = vadd.f32 %v442, %v496
    %v498 = vpop.f32.mrf.mxu0
    %499 = vdwg.mxu0
    %vm500 = vcmask 130048
    %501 = vst.msk [vmem:[#allocation2] sm:$0xff] %vm500, %v494
    %502 = vst.msk [vmem:[#allocation2 + $0x8] sm:$0xff] %vm500, %v497
    // Predicated region
    $region42: #{tpu_custom_call.1} parent=1 // pred_check
      _
    $region43: #{tpu_custom_call.1} parent=1 // pred_check_branch
      %504 = sbr.rel (0) target = $region45
    $region44: #{tpu_custom_call.1} parent=1 // pred_region
      %s506 = ssub.s32 256, 256
      %507 = vsyncadd [#allocation3], %s506
      %s508 = sshll.u32 [#allocation2], 4
      %s509 = int_to_ptr.vmem [resolvable:$true] %s508
      %514 = dma.vmem_to_hbm [thread:$0]  %s509, 256, %s10, [#allocation3], 128, 128, 8
    $region45: #{tpu_custom_call.1} parent=1 // pred_fallthru
      _
    // Predicated region
    $region46: #{tpu_custom_call.1} parent=1 // pred_check
      _
    $region47: #{tpu_custom_call.1} parent=1 // pred_check_branch
      %516 = sbr.rel (0) target = $region49
    $region48: #{tpu_custom_call.1} parent=1 // pred_region
      %517 = dma.done [#allocation3], 256
    $region49: #{tpu_custom_call.1} parent=1 // pred_fallthru
      _
    %518 = vsyncpa [#allocation3], 1

</llo_original>
